<compile_context>
chip_gen: v5e
topology: v5e:2x2
jax: 0.10.0
libtpu: 0.0.40
codegen_flags: <defaults>
</compile_context>

<pallas_src>
import functools

import jax
import jax.numpy as jnp
from jax import lax
from jax.experimental import pallas as pl
from jax.experimental.pallas import tpu as pltpu


def _round_up(v, m):
    return ((v + m - 1) // m) * m


def _p0gat_fused_kernel(x_ref, adj_ref, w1_ref, ad1_ref, b1_ref,
                        w2_ref, ad2_ref, b2_ref, out_ref,
                        *, s_col1: int, s_col2: int, negative_slope: float):
    # Dense neighbor mask (bf16 0/1 -> bool), loaded once for both layers.
    mask = adj_ref[...] > 0                                    # (Np, Np)
    neg_big = jnp.float32(-1e30)
    slope = jnp.float32(negative_slope)

    def gat(h_in, w_aug, a_dst_row, b_row, s_col):
        # One MXU pass: columns [:f_out] = h = h_in @ W,
        #               column  s_col    = h_in @ (W @ a_src) = s_src.
        hs = jnp.dot(h_in, w_aug, preferred_element_type=jnp.float32)   # (Np, Fp)
        s_src = hs[:, s_col:s_col + 1]                                   # (Np, 1)
        # s_dst[j] = a_dst . h_j   -> (1, Np) row (a_dst padded cols are 0,
        # so the folded s_src column never pollutes this contraction).
        s_dst = lax.dot_general(a_dst_row, hs, (((1,), (1,)), ((), ())),
                                preferred_element_type=jnp.float32)      # (1, Np)

        e = s_src + s_dst                                                # (Np, Np)
        e = jnp.maximum(e, slope * e)                                    # LeakyReLU
        e = jnp.where(mask, e, neg_big)                                  # mask non-edges

        # Masked softmax over neighbors j (self-loops guarantee denom >= 1,
        # and exp(-1e30 - m) underflows to exactly 0, so no second select).
        m = jnp.max(e, axis=-1, keepdims=True)
        p = jnp.exp(e - m)
        denom = jnp.sum(p, axis=-1, keepdims=True)
        alpha = p * pl.reciprocal(denom, approx=True)

        # Aggregate on the MXU. The garbage in output column s_col (alpha@s_src)
        # is killed downstream by zero-padded weight rows / the final slice.
        return jnp.dot(alpha, hs, preferred_element_type=jnp.float32) + b_row

    h1 = gat(x_ref[...], w1_ref[...], ad1_ref[...], b1_ref[...], s_col1)
    h1 = jnp.maximum(h1, 0.0)                                   # fused ReLU
    out = gat(h1, w2_ref[...], ad2_ref[...], b2_ref[...], s_col2)
    out_ref[...] = out.astype(out_ref.dtype)


def p0gat_pallas(x_pad, adj, w1, ad1, b1, w2, ad2, b2,
                 *, s_col1, s_col2, negative_slope=0.2):
    n_pad, f_in_pad = x_pad.shape
    f1p = w1.shape[1]
    f2p = w2.shape[1]

    kernel = functools.partial(_p0gat_fused_kernel, s_col1=s_col1,
                               s_col2=s_col2, negative_slope=negative_slope)

    flops = (2 * n_pad * f_in_pad * f1p + 2 * n_pad * n_pad * f1p
             + 2 * n_pad * f1p
             + 2 * n_pad * f1p * f2p + 2 * n_pad * n_pad * f2p
             + 2 * n_pad * f2p
             + 10 * n_pad * n_pad)
    transcendentals = 2 * n_pad * n_pad
    bytes_accessed = (x_pad.size * 4 + adj.size * 2 + w1.size * 4 + w2.size * 4
                      + (ad1.size + b1.size + ad2.size + b2.size) * 4
                      + n_pad * f2p * 4)

    return pl.pallas_call(
        kernel,
        out_shape=jax.ShapeDtypeStruct((n_pad, f2p), jnp.float32),
        grid=(1,),
        in_specs=[
            pl.BlockSpec((n_pad, f_in_pad), lambda i: (0, 0)),
            pl.BlockSpec((n_pad, n_pad), lambda i: (0, 0)),
            pl.BlockSpec((f_in_pad, f1p), lambda i: (0, 0)),
            pl.BlockSpec((1, f1p), lambda i: (0, 0)),
            pl.BlockSpec((1, f1p), lambda i: (0, 0)),
            pl.BlockSpec((f1p, f2p), lambda i: (0, 0)),
            pl.BlockSpec((1, f2p), lambda i: (0, 0)),
            pl.BlockSpec((1, f2p), lambda i: (0, 0)),
        ],
        out_specs=pl.BlockSpec((n_pad, f2p), lambda i: (0, 0)),
        compiler_params=pltpu.CompilerParams(
            dimension_semantics=("arbitrary",),
            vmem_limit_bytes=64 * 1024 * 1024),
        cost_estimate=pl.CostEstimate(flops=flops,
                                      transcendentals=transcendentals,
                                      bytes_accessed=bytes_accessed),
    )(x_pad, adj, w1, ad1, b1, w2, ad2, b2)


def init_gat_params(key, f_in, f_out):
    """Deterministic glorot-style init (stand-in for torch.manual_seed(12345))."""
    k_w, k_a, k_b = jax.random.split(key, 3)
    scale_w = jnp.sqrt(2.0 / (f_in + f_out)).astype(jnp.float32)
    w = jax.random.normal(k_w, (f_in, f_out), jnp.float32) * scale_w
    a = jax.random.normal(k_a, (2 * f_out, 1), jnp.float32) * 0.1
    a_src = a[:f_out, :]                         # (F_out, 1)
    a_dst = a[f_out:, :].reshape(1, f_out)       # (1, F_out)
    b = jax.random.normal(k_b, (1, f_out), jnp.float32) * 0.01
    return w, a_src, a_dst, b


def prepare_layer_params(w, a_src, a_dst, b, f_in_pad):
    """Pad to lane-dense 128 cols and fold a_src into W as an extra column."""
    f_in, f_out = w.shape
    f_out_pad = _round_up(f_out + 1, 128)
    w_aug = jnp.zeros((f_in_pad, f_out_pad), jnp.float32)
    w_aug = w_aug.at[:f_in, :f_out].set(w)
    w_aug = w_aug.at[:f_in, f_out].set((w @ a_src)[:, 0])     # folded s_src column
    a_dst_row = jnp.zeros((1, f_out_pad), jnp.float32).at[:, :f_out].set(a_dst)
    b_row = jnp.zeros((1, f_out_pad), jnp.float32).at[:, :f_out].set(b)
    return w_aug, a_dst_row, b_row, f_out, f_out_pad


def build_dense_adj(edge_index, num_nodes, n_pad):
    """adj[i, j] = 1 iff edge j -> i exists (plus self loops), bf16, padded."""
    src, dst = edge_index[0], edge_index[1]
    adj = jnp.zeros((n_pad, n_pad), jnp.float32)
    adj = adj.at[dst, src].set(1.0)
    adj = adj + jnp.eye(n_pad, dtype=jnp.float32)   # self loops (also padded rows)
    return jnp.minimum(adj, 1.0).astype(jnp.bfloat16)


def p0gat_forward(x, edge_index, params1, params2, *, negative_slope=0.2):
    n, f_in = x.shape
    n_pad = _round_up(max(n, 8), 128)
    f_in_pad = _round_up(f_in, 128)

    adj = build_dense_adj(edge_index, n, n_pad)
    w1, ad1, b1, f1, f1p = prepare_layer_params(*params1, f_in_pad)
    w2, ad2, b2, f2, _ = prepare_layer_params(*params2, f1p)
    x_pad = jnp.zeros((n_pad, f_in_pad), jnp.float32).at[:n, :f_in].set(x)

    out_pad = p0gat_pallas(x_pad, adj, w1, ad1, b1, w2, ad2, b2,
                           s_col1=f1, s_col2=f2, negative_slope=negative_slope)
    # TODO(synk): reference forward calls `self.conv2(x)` which is never defined
    # in __init__; no semantics to translate, so it is omitted.
    return out_pad[:n, :f2]


if __name__ == "__main__":
    # Small synthetic "Cora-like" problem: N nodes, F_in features,
    # hidden channels, num_classes classes.
    N, F_IN, HIDDEN, NUM_CLASSES = 32, 16, 32, 7

    key = jax.random.PRNGKey(0)
    k_x, k_e, _, _ = jax.random.split(key, 4)

    # Row-normalized node features (mimics NormalizeFeatures()).
    x = jax.random.uniform(k_x, (N, F_IN), jnp.float32)
    x = x / jnp.maximum(jnp.sum(x, axis=-1, keepdims=True), 1e-6)

    # Deterministic edge_index [2, E]: ring graph + a few extra random edges.
    ring_src = jnp.arange(N, dtype=jnp.int32)
    ring_dst = (ring_src + 1) % N
    extra_src = jax.random.randint(k_e, (N,), 0, N, dtype=jnp.int32)
    extra_dst = jax.random.randint(jax.random.fold_in(k_e, 1), (N,), 0, N,
                                   dtype=jnp.int32)
    edge_index = jnp.stack([
        jnp.concatenate([ring_src, ring_dst, extra_src]),
        jnp.concatenate([ring_dst, ring_src, extra_dst]),
    ])

    # Parameters (seeded deterministically, echoing torch.manual_seed(12345)).
    pkey = jax.random.PRNGKey(12345)
    kp1, kp2 = jax.random.split(pkey)
    params1 = init_gat_params(kp1, F_IN, HIDDEN)
    params2 = init_gat_params(kp2, HIDDEN, NUM_CLASSES)

    fwd = jax.jit(p0gat_forward)
    out = fwd(x, edge_index, params1, params2)
    out = jax.block_until_ready(out)
    assert out.shape == (N, NUM_CLASSES)
    assert bool(jnp.all(jnp.isfinite(out)))
    print("KERNEL_OK")
</pallas_src>

<mosaic_0001>
module attributes {stable_mosaic.version = 11 : i64} {
  func.func @_p0gat_fused_kernel(%arg0: i32, %arg1: memref<128x128xf32, #tpu.memory_space<vmem>>, %arg2: memref<128x128xbf16, #tpu.memory_space<vmem>>, %arg3: memref<128x128xf32, #tpu.memory_space<vmem>>, %arg4: memref<1x128xf32, #tpu.memory_space<vmem>>, %arg5: memref<1x128xf32, #tpu.memory_space<vmem>>, %arg6: memref<128x128xf32, #tpu.memory_space<vmem>>, %arg7: memref<1x128xf32, #tpu.memory_space<vmem>>, %arg8: memref<1x128xf32, #tpu.memory_space<vmem>>, %arg9: memref<128x128xf32, #tpu.memory_space<vmem>>) attributes {dimension_semantics = [#tpu.dimension_semantics<arbitrary>], iteration_bounds = array<i64: 1>, scalar_prefetch = 0 : i64, scratch_operands = 0 : i64, tpu.core_type = #tpu.core_type<tc>, window_params = [{pipeline_mode = #tpu.pipeline_mode<synchronous>, transform_indices = @transform_0, window_bounds = array<i64: 128, 128>}, {pipeline_mode = #tpu.pipeline_mode<synchronous>, transform_indices = @transform_1, window_bounds = array<i64: 128, 128>}, {pipeline_mode = #tpu.pipeline_mode<synchronous>, transform_indices = @transform_2, window_bounds = array<i64: 128, 128>}, {pipeline_mode = #tpu.pipeline_mode<synchronous>, transform_indices = @transform_3, window_bounds = array<i64: 1, 128>}, {pipeline_mode = #tpu.pipeline_mode<synchronous>, transform_indices = @transform_4, window_bounds = array<i64: 1, 128>}, {pipeline_mode = #tpu.pipeline_mode<synchronous>, transform_indices = @transform_5, window_bounds = array<i64: 128, 128>}, {pipeline_mode = #tpu.pipeline_mode<synchronous>, transform_indices = @transform_6, window_bounds = array<i64: 1, 128>}, {pipeline_mode = #tpu.pipeline_mode<synchronous>, transform_indices = @transform_7, window_bounds = array<i64: 1, 128>}, {pipeline_mode = #tpu.pipeline_mode<synchronous>, transform_indices = @transform_8, window_bounds = array<i64: 128, 128>}]} {
    %c0 = arith.constant 0 : index
    %c0_0 = arith.constant 0 : index
    %0 = vector.load %arg2[%c0, %c0_0] : memref<128x128xbf16, #tpu.memory_space<vmem>>, vector<128x128xbf16>
    %cst = arith.constant 0.000000e+00 : bf16
    %1 = vector.broadcast %cst : bf16 to vector<128x128xbf16>
    %2 = arith.cmpf ogt, %0, %1 : vector<128x128xbf16>
    %c0_1 = arith.constant 0 : index
    %c0_2 = arith.constant 0 : index
    %3 = vector.load %arg1[%c0_1, %c0_2] : memref<128x128xf32, #tpu.memory_space<vmem>>, vector<128x128xf32>
    %c0_3 = arith.constant 0 : index
    %c0_4 = arith.constant 0 : index
    %4 = vector.load %arg3[%c0_3, %c0_4] : memref<128x128xf32, #tpu.memory_space<vmem>>, vector<128x128xf32>
    %c0_5 = arith.constant 0 : index
    %c0_6 = arith.constant 0 : index
    %5 = vector.load %arg4[%c0_5, %c0_6] : memref<1x128xf32, #tpu.memory_space<vmem>>, vector<1x128xf32>
    %c0_7 = arith.constant 0 : index
    %c0_8 = arith.constant 0 : index
    %6 = vector.load %arg5[%c0_7, %c0_8] : memref<1x128xf32, #tpu.memory_space<vmem>>, vector<1x128xf32>
    %cst_9 = arith.constant dense<0.000000e+00> : vector<128x128xf32>
    %7 = tpu.matmul %3, %4, %cst_9 {dimension_numbers = #tpu.dot_dimension_numbers<[1], [0], [0], [1], [0, 0, 1, 1], [], []>} : vector<128x128xf32>, vector<128x128xf32>, vector<128x128xf32> -> vector<128x128xf32>
    %8 = vector.extract_strided_slice %7 {offsets = [0, 32], sizes = [128, 1], strides = [1, 1]} : vector<128x128xf32> to vector<128x1xf32>
    %cst_10 = arith.constant dense<0.000000e+00> : vector<1x128xf32>
    %9 = tpu.matmul %5, %7, %cst_10 {dimension_numbers = #tpu.dot_dimension_numbers<[1], [1], [0], [0], [0, 0, 1, 0], [], []>} : vector<1x128xf32>, vector<128x128xf32>, vector<1x128xf32> -> vector<1x128xf32>
    %10 = vector.broadcast %8 : vector<128x1xf32> to vector<128x128xf32>
    %11 = vector.broadcast %9 : vector<1x128xf32> to vector<128x128xf32>
    %12 = arith.addf %10, %11 : vector<128x128xf32>
    %cst_11 = arith.constant 2.000000e-01 : f32
    %13 = vector.broadcast %cst_11 : f32 to vector<128x128xf32>
    %14 = arith.mulf %13, %12 : vector<128x128xf32>
    %15 = arith.maximumf %12, %14 : vector<128x128xf32>
    %cst_12 = arith.constant -1.000000e+30 : f32
    %16 = vector.broadcast %cst_12 : f32 to vector<128x128xf32>
    %17 = arith.select %2, %15, %16 : vector<128x128xi1>, vector<128x128xf32>
    %cst_13 = arith.constant dense<0xFF800000> : vector<128xf32>
    %18 = vector.multi_reduction <maximumf>, %17, %cst_13 [1] : vector<128x128xf32> to vector<128xf32>
    %19 = vector.shape_cast %18 : vector<128xf32> to vector<128x1xf32>
    %20 = vector.broadcast %19 : vector<128x1xf32> to vector<128x128xf32>
    %21 = arith.subf %17, %20 : vector<128x128xf32>
    %22 = math.exp %21 : vector<128x128xf32>
    %cst_14 = arith.constant dense<0.000000e+00> : vector<128xf32>
    %23 = vector.multi_reduction <add>, %22, %cst_14 [1] : vector<128x128xf32> to vector<128xf32>
    %24 = vector.shape_cast %23 : vector<128xf32> to vector<128x1xf32>
    %25 = tpu.reciprocal %24 {approx = true} : vector<128x1xf32> -> vector<128x1xf32>
    %26 = vector.broadcast %25 : vector<128x1xf32> to vector<128x128xf32>
    %27 = arith.mulf %22, %26 : vector<128x128xf32>
    %cst_15 = arith.constant dense<0.000000e+00> : vector<128x128xf32>
    %28 = tpu.matmul %27, %7, %cst_15 {dimension_numbers = #tpu.dot_dimension_numbers<[1], [0], [0], [1], [0, 0, 1, 1], [], []>} : vector<128x128xf32>, vector<128x128xf32>, vector<128x128xf32> -> vector<128x128xf32>
    %29 = vector.broadcast %6 : vector<1x128xf32> to vector<128x128xf32>
    %30 = arith.addf %28, %29 : vector<128x128xf32>
    %cst_16 = arith.constant 0.000000e+00 : f32
    %31 = vector.broadcast %cst_16 : f32 to vector<128x128xf32>
    %32 = arith.maximumf %30, %31 : vector<128x128xf32>
    %c0_17 = arith.constant 0 : index
    %c0_18 = arith.constant 0 : index
    %33 = vector.load %arg6[%c0_17, %c0_18] : memref<128x128xf32, #tpu.memory_space<vmem>>, vector<128x128xf32>
    %c0_19 = arith.constant 0 : index
    %c0_20 = arith.constant 0 : index
    %34 = vector.load %arg7[%c0_19, %c0_20] : memref<1x128xf32, #tpu.memory_space<vmem>>, vector<1x128xf32>
    %c0_21 = arith.constant 0 : index
    %c0_22 = arith.constant 0 : index
    %35 = vector.load %arg8[%c0_21, %c0_22] : memref<1x128xf32, #tpu.memory_space<vmem>>, vector<1x128xf32>
    %cst_23 = arith.constant dense<0.000000e+00> : vector<128x128xf32>
    %36 = tpu.matmul %32, %33, %cst_23 {dimension_numbers = #tpu.dot_dimension_numbers<[1], [0], [0], [1], [0, 0, 1, 1], [], []>} : vector<128x128xf32>, vector<128x128xf32>, vector<128x128xf32> -> vector<128x128xf32>
    %37 = vector.extract_strided_slice %36 {offsets = [0, 7], sizes = [128, 1], strides = [1, 1]} : vector<128x128xf32> to vector<128x1xf32>
    %cst_24 = arith.constant dense<0.000000e+00> : vector<1x128xf32>
    %38 = tpu.matmul %34, %36, %cst_24 {dimension_numbers = #tpu.dot_dimension_numbers<[1], [1], [0], [0], [0, 0, 1, 0], [], []>} : vector<1x128xf32>, vector<128x128xf32>, vector<1x128xf32> -> vector<1x128xf32>
    %39 = vector.broadcast %37 : vector<128x1xf32> to vector<128x128xf32>
    %40 = vector.broadcast %38 : vector<1x128xf32> to vector<128x128xf32>
    %41 = arith.addf %39, %40 : vector<128x128xf32>
    %cst_25 = arith.constant 2.000000e-01 : f32
    %42 = vector.broadcast %cst_25 : f32 to vector<128x128xf32>
    %43 = arith.mulf %42, %41 : vector<128x128xf32>
    %44 = arith.maximumf %41, %43 : vector<128x128xf32>
    %cst_26 = arith.constant -1.000000e+30 : f32
    %45 = vector.broadcast %cst_26 : f32 to vector<128x128xf32>
    %46 = arith.select %2, %44, %45 : vector<128x128xi1>, vector<128x128xf32>
    %cst_27 = arith.constant dense<0xFF800000> : vector<128xf32>
    %47 = vector.multi_reduction <maximumf>, %46, %cst_27 [1] : vector<128x128xf32> to vector<128xf32>
    %48 = vector.shape_cast %47 : vector<128xf32> to vector<128x1xf32>
    %49 = vector.broadcast %48 : vector<128x1xf32> to vector<128x128xf32>
    %50 = arith.subf %46, %49 : vector<128x128xf32>
    %51 = math.exp %50 : vector<128x128xf32>
    %cst_28 = arith.constant dense<0.000000e+00> : vector<128xf32>
    %52 = vector.multi_reduction <add>, %51, %cst_28 [1] : vector<128x128xf32> to vector<128xf32>
    %53 = vector.shape_cast %52 : vector<128xf32> to vector<128x1xf32>
    %54 = tpu.reciprocal %53 {approx = true} : vector<128x1xf32> -> vector<128x1xf32>
    %55 = vector.broadcast %54 : vector<128x1xf32> to vector<128x128xf32>
    %56 = arith.mulf %51, %55 : vector<128x128xf32>
    %cst_29 = arith.constant dense<0.000000e+00> : vector<128x128xf32>
    %57 = tpu.matmul %56, %36, %cst_29 {dimension_numbers = #tpu.dot_dimension_numbers<[1], [0], [0], [1], [0, 0, 1, 1], [], []>} : vector<128x128xf32>, vector<128x128xf32>, vector<128x128xf32> -> vector<128x128xf32>
    %58 = vector.broadcast %35 : vector<1x128xf32> to vector<128x128xf32>
    %59 = arith.addf %57, %58 : vector<128x128xf32>
    %c0_30 = arith.constant 0 : index
    %c0_31 = arith.constant 0 : index
    %60 = vector.load %arg9[%c0_30, %c0_31] : memref<128x128xf32, #tpu.memory_space<vmem>>, vector<128x128xf32>
    tpu.vector_store %arg9[%c0_30, %c0_31], %59 {strides = array<i32>} : memref<128x128xf32, #tpu.memory_space<vmem>>, vector<128x128xf32>,
    return
  }
  func.func @transform_0(%arg0: i32) -> (i32, i32) {
    %c0_i32 = arith.constant 0 : i32
    %c0_i32_0 = arith.constant 0 : i32
    %c0_i32_1 = arith.constant 0 : i32
    return %c0_i32, %c0_i32_0 : i32, i32
  }
  func.func @transform_1(%arg0: i32) -> (i32, i32) {
    %c0_i32 = arith.constant 0 : i32
    %c0_i32_0 = arith.constant 0 : i32
    %c0_i32_1 = arith.constant 0 : i32
    return %c0_i32, %c0_i32_0 : i32, i32
  }
  func.func @transform_2(%arg0: i32) -> (i32, i32) {
    %c0_i32 = arith.constant 0 : i32
    %c0_i32_0 = arith.constant 0 : i32
    %c0_i32_1 = arith.constant 0 : i32
    return %c0_i32, %c0_i32_0 : i32, i32
  }
  func.func @transform_3(%arg0: i32) -> (i32, i32) {
    %c0_i32 = arith.constant 0 : i32
    %c0_i32_0 = arith.constant 0 : i32
    %c0_i32_1 = arith.constant 0 : i32
    return %c0_i32, %c0_i32_0 : i32, i32
  }
  func.func @transform_4(%arg0: i32) -> (i32, i32) {
    %c0_i32 = arith.constant 0 : i32
    %c0_i32_0 = arith.constant 0 : i32
    %c0_i32_1 = arith.constant 0 : i32
    return %c0_i32, %c0_i32_0 : i32, i32
  }
  func.func @transform_5(%arg0: i32) -> (i32, i32) {
    %c0_i32 = arith.constant 0 : i32
    %c0_i32_0 = arith.constant 0 : i32
    %c0_i32_1 = arith.constant 0 : i32
    return %c0_i32, %c0_i32_0 : i32, i32
  }
  func.func @transform_6(%arg0: i32) -> (i32, i32) {
    %c0_i32 = arith.constant 0 : i32
    %c0_i32_0 = arith.constant 0 : i32
    %c0_i32_1 = arith.constant 0 : i32
    return %c0_i32, %c0_i32_0 : i32, i32
  }
  func.func @transform_7(%arg0: i32) -> (i32, i32) {
    %c0_i32 = arith.constant 0 : i32
    %c0_i32_0 = arith.constant 0 : i32
    %c0_i32_1 = arith.constant 0 : i32
    return %c0_i32, %c0_i32_0 : i32, i32
  }
  func.func @transform_8(%arg0: i32) -> (i32, i32) {
    %c0_i32 = arith.constant 0 : i32
    %c0_i32_0 = arith.constant 0 : i32
    %c0_i32_1 = arith.constant 0 : i32
    return %c0_i32, %c0_i32_0 : i32, i32
  }
}

</mosaic_0001>

<llo_original>
// kernel: p0gat_forward.1
$region0: #{p0gat_forward.1}
  #allocation0 [shape = 'u32[]', space=smem, size = 0x4, offset = 0x4, fixed_abs, tag = 'smem constant byte address 0x4 - core index']
  #allocation1 [shape = 'u32[72,128]{1,0:T(1,128)}', space=vmem, size = 0x9000, scoped, tag = 'internal scratch']
  %s0 = inlined_call_operand.vmem [shape: f32[128,128], index: 0, kind: input, shape index: {}]
  %s1 = inlined_call_operand.vmem [shape: bf16[128,128], index: 1, kind: input, shape index: {}]
  %s2 = inlined_call_operand.vmem [shape: f32[128,128], index: 2, kind: input, shape index: {}]
  %s3 = inlined_call_operand.vmem [shape: f32[1,128], index: 3, kind: input, shape index: {}]
  %s4 = inlined_call_operand.vmem [shape: f32[1,128], index: 4, kind: input, shape index: {}]
  %s5 = inlined_call_operand.vmem [shape: f32[128,128], index: 5, kind: input, shape index: {}]
  %s6 = inlined_call_operand.vmem [shape: f32[1,128], index: 6, kind: input, shape index: {}]
  %s7 = inlined_call_operand.vmem [shape: f32[1,128], index: 7, kind: input, shape index: {}]
  %s8 = inlined_call_operand.vmem [shape: f32[128,128], index: 8, kind: output, shape index: {}]
  %s9 = sld [smem:[#allocation0]]
  $region42: #{p0gat_forward.1} parent=0
    _
  %s11 = ssub.s32 1, %s9
  %s12 = scalar_select 0, %s11, %s9
  // Predicated region
  $region2: #{p0gat_forward.1} parent=0 // pred_check
    _
  $region3: #{p0gat_forward.1} parent=0 // pred_check_branch
    %14 = sbr.rel (0) target = $region5
  $region4: #{p0gat_forward.1} parent=0 // pred_region
    _
  $region5: #{p0gat_forward.1} parent=0 // pred_fallthru
    _
  // Predicated region
  $region6: #{p0gat_forward.1} parent=0 // pred_check
    _
  $region7: #{p0gat_forward.1} parent=0 // pred_check_branch
    %16 = sbr.rel (0) target = $region9
  $region8: #{p0gat_forward.1} parent=0 // pred_region
    _
  $region9: #{p0gat_forward.1} parent=0 // pred_fallthru
    _
  // Predicated region
  $region10: #{p0gat_forward.1} parent=0 // pred_check
    _
  $region11: #{p0gat_forward.1} parent=0 // pred_check_branch
    %18 = sbr.rel (0) target = $region13
  $region12: #{p0gat_forward.1} parent=0 // pred_region
    _
  $region13: #{p0gat_forward.1} parent=0 // pred_fallthru
    _
  // Predicated region
  $region14: #{p0gat_forward.1} parent=0 // pred_check
    _
  $region15: #{p0gat_forward.1} parent=0 // pred_check_branch
    %20 = sbr.rel (0) target = $region17
  $region16: #{p0gat_forward.1} parent=0 // pred_region
    _
  $region17: #{p0gat_forward.1} parent=0 // pred_fallthru
    _
  // Predicated region
  $region18: #{p0gat_forward.1} parent=0 // pred_check
    _
  $region19: #{p0gat_forward.1} parent=0 // pred_check_branch
    %22 = sbr.rel (0) target = $region21
  $region20: #{p0gat_forward.1} parent=0 // pred_region
    _
  $region21: #{p0gat_forward.1} parent=0 // pred_fallthru
    _
  // Predicated region
  $region22: #{p0gat_forward.1} parent=0 // pred_check
    _
  $region23: #{p0gat_forward.1} parent=0 // pred_check_branch
    %24 = sbr.rel (0) target = $region25
  $region24: #{p0gat_forward.1} parent=0 // pred_region
    _
  $region25: #{p0gat_forward.1} parent=0 // pred_fallthru
    _
  // Predicated region
  $region26: #{p0gat_forward.1} parent=0 // pred_check
    _
  $region27: #{p0gat_forward.1} parent=0 // pred_check_branch
    %26 = sbr.rel (0) target = $region29
  $region28: #{p0gat_forward.1} parent=0 // pred_region
    _
  $region29: #{p0gat_forward.1} parent=0 // pred_fallthru
    _
  // Predicated region
  $region30: #{p0gat_forward.1} parent=0 // pred_check
    _
  $region31: #{p0gat_forward.1} parent=0 // pred_check_branch
    %28 = sbr.rel (0) target = $region33
  $region32: #{p0gat_forward.1} parent=0 // pred_region
    _
  $region33: #{p0gat_forward.1} parent=0 // pred_fallthru
    _
  %v29 = vld [vmem:[%s1] sm:$0xf]
  %v30 = vld [vmem:[%s1 + $0x4] sm:$0xf]
  %v31 = vld [vmem:[%s1 + $0x8] sm:$0xf]
  %v32 = vld [vmem:[%s1 + $0xc] sm:$0xf]
  %v33 = vld [vmem:[%s1 + $0x10] sm:$0xf]
  %v34 = vld [vmem:[%s1 + $0x14] sm:$0xf]
  %v35 = vld [vmem:[%s1 + $0x18] sm:$0xf]
  %v36 = vld [vmem:[%s1 + $0x1c] sm:$0xf]
  %v37 = vld [vmem:[%s1 + $0x20] sm:$0xf]
  %v38 = vld [vmem:[%s1 + $0x24] sm:$0xf]
  %v39 = vld [vmem:[%s1 + $0x28] sm:$0xf]
  %v40 = vld [vmem:[%s1 + $0x2c] sm:$0xf]
  %v41 = vld [vmem:[%s1 + $0x30] sm:$0xf]
  %v42 = vld [vmem:[%s1 + $0x34] sm:$0xf]
  %v43 = vld [vmem:[%s1 + $0x38] sm:$0xf]
  %v44 = vld [vmem:[%s1 + $0x3c] sm:$0xf]
  %v45 = vunpack.c.l.bf16 %v29
  %v46 = vunpack.c.l.bf16 %v30
  %v47 = vunpack.c.l.bf16 %v31
  %v48 = vunpack.c.l.bf16 %v32
  %v49 = vunpack.c.l.bf16 %v33
  %v50 = vunpack.c.l.bf16 %v34
  %v51 = vunpack.c.l.bf16 %v35
  %v52 = vunpack.c.l.bf16 %v36
  %v53 = vunpack.c.l.bf16 %v37
  %v54 = vunpack.c.l.bf16 %v38
  %v55 = vunpack.c.l.bf16 %v39
  %v56 = vunpack.c.l.bf16 %v40
  %v57 = vunpack.c.l.bf16 %v41
  %v58 = vunpack.c.l.bf16 %v42
  %v59 = vunpack.c.l.bf16 %v43
  %v60 = vunpack.c.l.bf16 %v44
  %vm61 = vcmp.gt.f32.partialorder %v45, 0.0
  %vm62 = vcmp.gt.f32.partialorder %v46, 0.0
  %vm63 = vcmp.gt.f32.partialorder %v47, 0.0
  %vm64 = vcmp.gt.f32.partialorder %v48, 0.0
  %vm65 = vcmp.gt.f32.partialorder %v49, 0.0
  %vm66 = vcmp.gt.f32.partialorder %v50, 0.0
  %vm67 = vcmp.gt.f32.partialorder %v51, 0.0
  %vm68 = vcmp.gt.f32.partialorder %v52, 0.0
  %vm69 = vcmp.gt.f32.partialorder %v53, 0.0
  %vm70 = vcmp.gt.f32.partialorder %v54, 0.0
  %vm71 = vcmp.gt.f32.partialorder %v55, 0.0
  %vm72 = vcmp.gt.f32.partialorder %v56, 0.0
  %vm73 = vcmp.gt.f32.partialorder %v57, 0.0
  %vm74 = vcmp.gt.f32.partialorder %v58, 0.0
  %vm75 = vcmp.gt.f32.partialorder %v59, 0.0
  %vm76 = vcmp.gt.f32.partialorder %v60, 0.0
  %v77 = vld [vmem:[%s0] sm:$0xff]
  %v78 = vld [vmem:[%s0 + $0x8] sm:$0xff]
  %v79 = vld [vmem:[%s0 + $0x10] sm:$0xff]
  %v80 = vld [vmem:[%s0 + $0x18] sm:$0xff]
  %v81 = vld [vmem:[%s0 + $0x20] sm:$0xff]
  %v82 = vld [vmem:[%s0 + $0x28] sm:$0xff]
  %v83 = vld [vmem:[%s0 + $0x30] sm:$0xff]
  %v84 = vld [vmem:[%s0 + $0x38] sm:$0xff]
  %v85 = vld [vmem:[%s0 + $0x40] sm:$0xff]
  %v86 = vld [vmem:[%s0 + $0x48] sm:$0xff]
  %v87 = vld [vmem:[%s0 + $0x50] sm:$0xff]
  %v88 = vld [vmem:[%s0 + $0x58] sm:$0xff]
  %v89 = vld [vmem:[%s0 + $0x60] sm:$0xff]
  %v90 = vld [vmem:[%s0 + $0x68] sm:$0xff]
  %v91 = vld [vmem:[%s0 + $0x70] sm:$0xff]
  %v92 = vld [vmem:[%s0 + $0x78] sm:$0xff]
  %v93 = vld [vmem:[%s2] sm:$0xff]
  %v94 = vld [vmem:[%s2 + $0x8] sm:$0xff]
  %v95 = vld [vmem:[%s2 + $0x10] sm:$0xff]
  %v96 = vld [vmem:[%s2 + $0x18] sm:$0xff]
  %v97 = vld [vmem:[%s2 + $0x20] sm:$0xff]
  %v98 = vld [vmem:[%s2 + $0x28] sm:$0xff]
  %v99 = vld [vmem:[%s2 + $0x30] sm:$0xff]
  %v100 = vld [vmem:[%s2 + $0x38] sm:$0xff]
  %v101 = vld [vmem:[%s2 + $0x40] sm:$0xff]
  %v102 = vld [vmem:[%s2 + $0x48] sm:$0xff]
  %v103 = vld [vmem:[%s2 + $0x50] sm:$0xff]
  %v104 = vld [vmem:[%s2 + $0x58] sm:$0xff]
  %v105 = vld [vmem:[%s2 + $0x60] sm:$0xff]
  %v106 = vld [vmem:[%s2 + $0x68] sm:$0xff]
  %v107 = vld [vmem:[%s2 + $0x70] sm:$0xff]
  %v108 = vld [vmem:[%s2 + $0x78] sm:$0xff]
  %v109 = vld [vmem:[%s3] sm:$0x1]
  %v110 = vld [vmem:[%s4] sm:$0x1]
  %111 = vmatpush.msra.mxu0 %v108
  %112 = vmatpush.msra.mxu0 %v107
  %113 = vmatpush.msra.mxu0 %v106
  %114 = vmatpush.msra.mxu0 %v105
  %115 = vmatpush.msra.mxu0 %v104
  %116 = vmatpush.msra.mxu0 %v103
  %117 = vmatpush.msra.mxu0 %v102
  %118 = vmatpush.msra.mxu0 %v101
  %119 = vmatpush.msra.mxu0 %v100
  %120 = vmatpush.msra.mxu0 %v99
  %121 = vmatpush.msra.mxu0 %v98
  %122 = vmatpush.msra.mxu0 %v97
  %123 = vmatpush.msra.mxu0 %v96
  %124 = vmatpush.msra.mxu0 %v95
  %125 = vmatpush.msra.mxu0 %v94
  %126 = vmatpush.msra.mxu0 %v93
  %127 = vmatmul.f32.gmra.mxu0 %v77
  %v128 = vpop.f32.mrf.mxu0
  %v129 = vadd.f32 0.0, %v128
  %130 = vmatmul.f32.gmra.mxu0 %v78
  %v131 = vpop.f32.mrf.mxu0
  %v132 = vadd.f32 0.0, %v131
  %133 = vmatmul.f32.gmra.mxu0 %v79
  %v134 = vpop.f32.mrf.mxu0
  %v135 = vadd.f32 0.0, %v134
  %136 = vmatmul.f32.gmra.mxu0 %v80
  %v137 = vpop.f32.mrf.mxu0
  %v138 = vadd.f32 0.0, %v137
  %139 = vmatmul.f32.gmra.mxu0 %v81
  %v140 = vpop.f32.mrf.mxu0
  %v141 = vadd.f32 0.0, %v140
  %142 = vmatmul.f32.gmra.mxu0 %v82
  %v143 = vpop.f32.mrf.mxu0
  %v144 = vadd.f32 0.0, %v143
  %145 = vmatmul.f32.gmra.mxu0 %v83
  %v146 = vpop.f32.mrf.mxu0
  %v147 = vadd.f32 0.0, %v146
  %148 = vmatmul.f32.gmra.mxu0 %v84
  %v149 = vpop.f32.mrf.mxu0
  %v150 = vadd.f32 0.0, %v149
  %151 = vmatmul.f32.gmra.mxu0 %v85
  %v152 = vpop.f32.mrf.mxu0
  %v153 = vadd.f32 0.0, %v152
  %154 = vmatmul.f32.gmra.mxu0 %v86
  %v155 = vpop.f32.mrf.mxu0
  %v156 = vadd.f32 0.0, %v155
  %157 = vmatmul.f32.gmra.mxu0 %v87
  %v158 = vpop.f32.mrf.mxu0
  %v159 = vadd.f32 0.0, %v158
  %160 = vmatmul.f32.gmra.mxu0 %v88
  %v161 = vpop.f32.mrf.mxu0
  %v162 = vadd.f32 0.0, %v161
  %163 = vmatmul.f32.gmra.mxu0 %v89
  %v164 = vpop.f32.mrf.mxu0
  %v165 = vadd.f32 0.0, %v164
  %166 = vmatmul.f32.gmra.mxu0 %v90
  %v167 = vpop.f32.mrf.mxu0
  %v168 = vadd.f32 0.0, %v167
  %169 = vmatmul.f32.gmra.mxu0 %v91
  %v170 = vpop.f32.mrf.mxu0
  %v171 = vadd.f32 0.0, %v170
  %172 = vmatmul.f32.gmra.mxu0 %v92
  %v173 = vpop.f32.mrf.mxu0
  %v174 = vadd.f32 0.0, %v173
  %175 = vdwg.mxu0
  %176 = vmatpush.xpose.msra.mxu0 %v174
  %177 = vmatpush.xpose.msra.mxu0 %v171
  %178 = vmatpush.xpose.msra.mxu0 %v168
  %179 = vmatpush.xpose.msra.mxu0 %v165
  %180 = vmatpush.xpose.msra.mxu0 %v162
  %181 = vmatpush.xpose.msra.mxu0 %v159
  %182 = vmatpush.xpose.msra.mxu0 %v156
  %183 = vmatpush.xpose.msra.mxu0 %v153
  %184 = vmatpush.xpose.msra.mxu0 %v150
  %185 = vmatpush.xpose.msra.mxu0 %v147
  %186 = vmatpush.xpose.msra.mxu0 %v144
  %187 = vmatpush.xpose.msra.mxu0 %v141
  %188 = vmatpush.xpose.msra.mxu0 %v138
  %189 = vmatpush.xpose.msra.mxu0 %v135
  %190 = vmatpush.xpose.msra.mxu0 %v132
  %191 = vmatpush.xpose.msra.mxu0 %v129
  %192 = vmatmul.f32.gmra.mxu0 %v109
  %v193 = vpop.f32.mrf.mxu0
  %v194 = vadd.f32 0.0, %v193
  %195 = vdwg.mxu0
  %197 = vset.pattern.permute.xlu0 32
  %198 = vperm.xlu0 %197, %v129
  %v199 = vpop.permute.xlu0 %198
  %202 = vset.pattern.permute.xlu0 32
  %203 = vperm.xlu0 %202, %v132
  %v204 = vpop.permute.xlu0 %203
  %207 = vset.pattern.permute.xlu0 32
  %208 = vperm.xlu0 %207, %v135
  %v209 = vpop.permute.xlu0 %208
  %212 = vset.pattern.permute.xlu0 32
  %213 = vperm.xlu0 %212, %v138
  %v214 = vpop.permute.xlu0 %213
  %217 = vset.pattern.permute.xlu0 32
  %218 = vperm.xlu0 %217, %v141
  %v219 = vpop.permute.xlu0 %218
  %222 = vset.pattern.permute.xlu0 32
  %223 = vperm.xlu0 %222, %v144
  %v224 = vpop.permute.xlu0 %223
  %227 = vset.pattern.permute.xlu0 32
  %228 = vperm.xlu0 %227, %v147
  %v229 = vpop.permute.xlu0 %228
  %232 = vset.pattern.permute.xlu0 32
  %233 = vperm.xlu0 %232, %v150
  %v234 = vpop.permute.xlu0 %233
  %237 = vset.pattern.permute.xlu0 32
  %238 = vperm.xlu0 %237, %v153
  %v239 = vpop.permute.xlu0 %238
  %242 = vset.pattern.permute.xlu0 32
  %243 = vperm.xlu0 %242, %v156
  %v244 = vpop.permute.xlu0 %243
  %247 = vset.pattern.permute.xlu0 32
  %248 = vperm.xlu0 %247, %v159
  %v249 = vpop.permute.xlu0 %248
  %252 = vset.pattern.permute.xlu0 32
  %253 = vperm.xlu0 %252, %v162
  %v254 = vpop.permute.xlu0 %253
  %257 = vset.pattern.permute.xlu0 32
  %258 = vperm.xlu0 %257, %v165
  %v259 = vpop.permute.xlu0 %258
  %262 = vset.pattern.permute.xlu0 32
  %263 = vperm.xlu0 %262, %v168
  %v264 = vpop.permute.xlu0 %263
  %267 = vset.pattern.permute.xlu0 32
  %268 = vperm.xlu0 %267, %v171
  %v269 = vpop.permute.xlu0 %268
  %272 = vset.pattern.permute.xlu0 32
  %273 = vperm.xlu0 %272, %v174
  %v274 = vpop.permute.xlu0 %273
  %v276 = vperm.slane %v194, 0
  %v277 = vadd.f32 %v199, %v276
  %v278 = vadd.f32 %v204, %v276
  %v279 = vadd.f32 %v209, %v276
  %v280 = vadd.f32 %v214, %v276
  %v281 = vadd.f32 %v219, %v276
  %v282 = vadd.f32 %v224, %v276
  %v283 = vadd.f32 %v229, %v276
  %v284 = vadd.f32 %v234, %v276
  %v285 = vadd.f32 %v239, %v276
  %v286 = vadd.f32 %v244, %v276
  %v287 = vadd.f32 %v249, %v276
  %v288 = vadd.f32 %v254, %v276
  %v289 = vadd.f32 %v259, %v276
  %v290 = vadd.f32 %v264, %v276
  %v291 = vadd.f32 %v269, %v276
  %v292 = vadd.f32 %v274, %v276
  %v293 = vmul.f32 %v277, 0.2
  %v294 = vmul.f32 %v278, 0.2
  %v295 = vmul.f32 %v279, 0.2
  %v296 = vmul.f32 %v280, 0.2
  %v297 = vmul.f32 %v281, 0.2
  %v298 = vmul.f32 %v282, 0.2
  %v299 = vmul.f32 %v283, 0.2
  %v300 = vmul.f32 %v284, 0.2
  %v301 = vmul.f32 %v285, 0.2
  %v302 = vmul.f32 %v286, 0.2
  %v303 = vmul.f32 %v287, 0.2
  %v304 = vmul.f32 %v288, 0.2
  %v305 = vmul.f32 %v289, 0.2
  %v306 = vmul.f32 %v290, 0.2
  %v307 = vmul.f32 %v291, 0.2
  %v308 = vmul.f32 %v292, 0.2
  %v309 = vmax.f32 %v277, %v293
  %v310 = vmax.f32 %v278, %v294
  %v311 = vmax.f32 %v279, %v295
  %v312 = vmax.f32 %v280, %v296
  %v313 = vmax.f32 %v281, %v297
  %v314 = vmax.f32 %v282, %v298
  %v315 = vmax.f32 %v283, %v299
  %v316 = vmax.f32 %v284, %v300
  %v317 = vmax.f32 %v285, %v301
  %v318 = vmax.f32 %v286, %v302
  %v319 = vmax.f32 %v287, %v303
  %v320 = vmax.f32 %v288, %v304
  %v321 = vmax.f32 %v289, %v305
  %v322 = vmax.f32 %v290, %v306
  %v323 = vmax.f32 %v291, %v307
  %v324 = vmax.f32 %v292, %v308
  %v325 = vsel %vm61, %v309, -1e+30
  %v326 = vsel %vm62, %v310, -1e+30
  %v327 = vsel %vm63, %v311, -1e+30
  %v328 = vsel %vm64, %v312, -1e+30
  %v329 = vsel %vm65, %v313, -1e+30
  %v330 = vsel %vm66, %v314, -1e+30
  %v331 = vsel %vm67, %v315, -1e+30
  %v332 = vsel %vm68, %v316, -1e+30
  %v333 = vsel %vm69, %v317, -1e+30
  %v334 = vsel %vm70, %v318, -1e+30
  %v335 = vsel %vm71, %v319, -1e+30
  %v336 = vsel %vm72, %v320, -1e+30
  %v337 = vsel %vm73, %v321, -1e+30
  %v338 = vsel %vm74, %v322, -1e+30
  %v339 = vsel %vm75, %v323, -1e+30
  %v340 = vsel %vm76, %v324, -1e+30
  %341 = vmax.xlane.f32.xlu0 %v325
  %v342 = vpop.xlane.xlu0 %341
  %343 = vmax.xlane.f32.xlu0 %v326
  %v344 = vpop.xlane.xlu0 %343
  %345 = vmax.xlane.f32.xlu0 %v327
  %v346 = vpop.xlane.xlu0 %345
  %347 = vmax.xlane.f32.xlu0 %v328
  %v348 = vpop.xlane.xlu0 %347
  %349 = vmax.xlane.f32.xlu0 %v329
  %v350 = vpop.xlane.xlu0 %349
  %351 = vmax.xlane.f32.xlu0 %v330
  %v352 = vpop.xlane.xlu0 %351
  %353 = vmax.xlane.f32.xlu0 %v331
  %v354 = vpop.xlane.xlu0 %353
  %355 = vmax.xlane.f32.xlu0 %v332
  %v356 = vpop.xlane.xlu0 %355
  %357 = vmax.xlane.f32.xlu0 %v333
  %v358 = vpop.xlane.xlu0 %357
  %359 = vmax.xlane.f32.xlu0 %v334
  %v360 = vpop.xlane.xlu0 %359
  %361 = vmax.xlane.f32.xlu0 %v335
  %v362 = vpop.xlane.xlu0 %361
  %363 = vmax.xlane.f32.xlu0 %v336
  %v364 = vpop.xlane.xlu0 %363
  %365 = vmax.xlane.f32.xlu0 %v337
  %v366 = vpop.xlane.xlu0 %365
  %367 = vmax.xlane.f32.xlu0 %v338
  %v368 = vpop.xlane.xlu0 %367
  %369 = vmax.xlane.f32.xlu0 %v339
  %v370 = vpop.xlane.xlu0 %369
  %371 = vmax.xlane.f32.xlu0 %v340
  %v372 = vpop.xlane.xlu0 %371
  %v373 = vsub.f32 %v325, %v342
  %v374 = vsub.f32 %v326, %v344
  %v375 = vsub.f32 %v327, %v346
  %v376 = vsub.f32 %v328, %v348
  %v377 = vsub.f32 %v329, %v350
  %v378 = vsub.f32 %v330, %v352
  %v379 = vsub.f32 %v331, %v354
  %v380 = vsub.f32 %v332, %v356
  %v381 = vsub.f32 %v333, %v358
  %v382 = vsub.f32 %v334, %v360
  %v383 = vsub.f32 %v335, %v362
  %v384 = vsub.f32 %v336, %v364
  %v385 = vsub.f32 %v337, %v366
  %v386 = vsub.f32 %v338, %v368
  %v387 = vsub.f32 %v339, %v370
  %v388 = vsub.f32 %v340, %v372
  %v389 = vmul.f32 %v373, 1.442695
  %v390 = vpow.pop %v389
  %v391 = vmul.f32 %v374, 1.442695
  %v392 = vpow.pop %v391
  %v393 = vmul.f32 %v375, 1.442695
  %v394 = vpow.pop %v393
  %v395 = vmul.f32 %v376, 1.442695
  %v396 = vpow.pop %v395
  %v397 = vmul.f32 %v377, 1.442695
  %v398 = vpow.pop %v397
  %v399 = vmul.f32 %v378, 1.442695
  %v400 = vpow.pop %v399
  %v401 = vmul.f32 %v379, 1.442695
  %v402 = vpow.pop %v401
  %v403 = vmul.f32 %v380, 1.442695
  %v404 = vpow.pop %v403
  %v405 = vmul.f32 %v381, 1.442695
  %v406 = vpow.pop %v405
  %v407 = vmul.f32 %v382, 1.442695
  %v408 = vpow.pop %v407
  %v409 = vmul.f32 %v383, 1.442695
  %v410 = vpow.pop %v409
  %v411 = vmul.f32 %v384, 1.442695
  %v412 = vpow.pop %v411
  %v413 = vmul.f32 %v385, 1.442695
  %v414 = vpow.pop %v413
  %v415 = vmul.f32 %v386, 1.442695
  %v416 = vpow.pop %v415
  %v417 = vmul.f32 %v387, 1.442695
  %v418 = vpow.pop %v417
  %v419 = vmul.f32 %v388, 1.442695
  %v420 = vpow.pop %v419
  %421 = vadd.xlane.f32.xlu0 %v390
  %v422 = vpop.xlane.xlu0 %421
  %423 = vadd.xlane.f32.xlu0 %v392
  %v424 = vpop.xlane.xlu0 %423
  %425 = vadd.xlane.f32.xlu0 %v394
  %v426 = vpop.xlane.xlu0 %425
  %427 = vadd.xlane.f32.xlu0 %v396
  %v428 = vpop.xlane.xlu0 %427
  %429 = vadd.xlane.f32.xlu0 %v398
  %v430 = vpop.xlane.xlu0 %429
  %431 = vadd.xlane.f32.xlu0 %v400
  %v432 = vpop.xlane.xlu0 %431
  %433 = vadd.xlane.f32.xlu0 %v402
  %v434 = vpop.xlane.xlu0 %433
  %435 = vadd.xlane.f32.xlu0 %v404
  %v436 = vpop.xlane.xlu0 %435
  %437 = vadd.xlane.f32.xlu0 %v406
  %v438 = vpop.xlane.xlu0 %437
  %439 = vadd.xlane.f32.xlu0 %v408
  %v440 = vpop.xlane.xlu0 %439
  %441 = vadd.xlane.f32.xlu0 %v410
  %v442 = vpop.xlane.xlu0 %441
  %443 = vadd.xlane.f32.xlu0 %v412
  %v444 = vpop.xlane.xlu0 %443
  %445 = vadd.xlane.f32.xlu0 %v414
  %v446 = vpop.xlane.xlu0 %445
  %447 = vadd.xlane.f32.xlu0 %v416
  %v448 = vpop.xlane.xlu0 %447
  %449 = vadd.xlane.f32.xlu0 %v418
  %v450 = vpop.xlane.xlu0 %449
  %451 = vadd.xlane.f32.xlu0 %v420
  %v452 = vpop.xlane.xlu0 %451
  %v453 = vrcp.pop %v422
  %v454 = vrcp.pop %v424
  %v455 = vrcp.pop %v426
  %v456 = vrcp.pop %v428
  %v457 = vrcp.pop %v430
  %v458 = vrcp.pop %v432
  %v459 = vrcp.pop %v434
  %v460 = vrcp.pop %v436
  %v461 = vrcp.pop %v438
  %v462 = vrcp.pop %v440
  %v463 = vrcp.pop %v442
  %v464 = vrcp.pop %v444
  %v465 = vrcp.pop %v446
  %v466 = vrcp.pop %v448
  %v467 = vrcp.pop %v450
  %v468 = vrcp.pop %v452
  %v469 = vmul.f32 %v390, %v453
  %v470 = vmul.f32 %v392, %v454
  %v471 = vmul.f32 %v394, %v455
  %v472 = vmul.f32 %v396, %v456
  %v473 = vmul.f32 %v398, %v457
  %v474 = vmul.f32 %v400, %v458
  %v475 = vmul.f32 %v402, %v459
  %v476 = vmul.f32 %v404, %v460
  %v477 = vmul.f32 %v406, %v461
  %v478 = vmul.f32 %v408, %v462
  %v479 = vmul.f32 %v410, %v463
  %v480 = vmul.f32 %v412, %v464
  %v481 = vmul.f32 %v414, %v465
  %v482 = vmul.f32 %v416, %v466
  %v483 = vmul.f32 %v418, %v467
  %v484 = vmul.f32 %v420, %v468
  %v486 = vperm.slane %v110, 0
  %488 = vmatpush.msra.mxu0 %v174
  %489 = vmatpush.msra.mxu0 %v171
  %490 = vmatpush.msra.mxu0 %v168
  %491 = vmatpush.msra.mxu0 %v165
  %492 = vmatpush.msra.mxu0 %v162
  %493 = vmatpush.msra.mxu0 %v159
  %494 = vmatpush.msra.mxu0 %v156
  %495 = vmatpush.msra.mxu0 %v153
  %496 = vmatpush.msra.mxu0 %v150
  %497 = vmatpush.msra.mxu0 %v147
  %498 = vmatpush.msra.mxu0 %v144
  %499 = vmatpush.msra.mxu0 %v141
  %500 = vmatpush.msra.mxu0 %v138
  %501 = vmatpush.msra.mxu0 %v135
  %502 = vmatpush.msra.mxu0 %v132
  %503 = vmatpush.msra.mxu0 %v129
  %504 = vmatmul.f32.gmra.mxu0 %v469
  %v505 = vpop.f32.mrf.mxu0
  %v506 = vadd.f32 %v486, %v505
  %507 = vmatmul.f32.gmra.mxu0 %v470
  %v508 = vpop.f32.mrf.mxu0
  %v509 = vadd.f32 %v486, %v508
  %510 = vmatmul.f32.gmra.mxu0 %v471
  %v511 = vpop.f32.mrf.mxu0
  %v512 = vadd.f32 %v486, %v511
  %513 = vmatmul.f32.gmra.mxu0 %v472
  %v514 = vpop.f32.mrf.mxu0
  %v515 = vadd.f32 %v486, %v514
  %516 = vmatmul.f32.gmra.mxu0 %v473
  %v517 = vpop.f32.mrf.mxu0
  %v518 = vadd.f32 %v486, %v517
  %519 = vmatmul.f32.gmra.mxu0 %v474
  %v520 = vpop.f32.mrf.mxu0
  %v521 = vadd.f32 %v486, %v520
  %522 = vmatmul.f32.gmra.mxu0 %v475
  %v523 = vpop.f32.mrf.mxu0
  %v524 = vadd.f32 %v486, %v523
  %525 = vmatmul.f32.gmra.mxu0 %v476
  %v526 = vpop.f32.mrf.mxu0
  %v527 = vadd.f32 %v486, %v526
  %528 = vmatmul.f32.gmra.mxu0 %v477
  %v529 = vpop.f32.mrf.mxu0
  %v530 = vadd.f32 %v486, %v529
  %531 = vmatmul.f32.gmra.mxu0 %v478
  %v532 = vpop.f32.mrf.mxu0
  %v533 = vadd.f32 %v486, %v532
  %534 = vmatmul.f32.gmra.mxu0 %v479
  %v535 = vpop.f32.mrf.mxu0
  %v536 = vadd.f32 %v486, %v535
  %537 = vmatmul.f32.gmra.mxu0 %v480
  %v538 = vpop.f32.mrf.mxu0
  %v539 = vadd.f32 %v486, %v538
  %540 = vmatmul.f32.gmra.mxu0 %v481
  %v541 = vpop.f32.mrf.mxu0
  %v542 = vadd.f32 %v486, %v541
  %543 = vmatmul.f32.gmra.mxu0 %v482
  %v544 = vpop.f32.mrf.mxu0
  %v545 = vadd.f32 %v486, %v544
  %546 = vmatmul.f32.gmra.mxu0 %v483
  %v547 = vpop.f32.mrf.mxu0
  %v548 = vadd.f32 %v486, %v547
  %549 = vmatmul.f32.gmra.mxu0 %v484
  %v550 = vpop.f32.mrf.mxu0
  %v551 = vadd.f32 %v486, %v550
  %552 = vdwg.mxu0
  %v553 = vmax.f32 %v506, 0.0
  %v554 = vmax.f32 %v509, 0.0
  %v555 = vmax.f32 %v512, 0.0
  %v556 = vmax.f32 %v515, 0.0
  %v557 = vmax.f32 %v518, 0.0
  %v558 = vmax.f32 %v521, 0.0
  %v559 = vmax.f32 %v524, 0.0
  %v560 = vmax.f32 %v527, 0.0
  %v561 = vmax.f32 %v530, 0.0
  %v562 = vmax.f32 %v533, 0.0
  %v563 = vmax.f32 %v536, 0.0
  %v564 = vmax.f32 %v539, 0.0
  %v565 = vmax.f32 %v542, 0.0
  %v566 = vmax.f32 %v545, 0.0
  %v567 = vmax.f32 %v548, 0.0
  %v568 = vmax.f32 %v551, 0.0
  %v569 = vld [vmem:[%s5] sm:$0xff]
  %v570 = vld [vmem:[%s5 + $0x8] sm:$0xff]
  %v571 = vld [vmem:[%s5 + $0x10] sm:$0xff]
  %v572 = vld [vmem:[%s5 + $0x18] sm:$0xff]
  %v573 = vld [vmem:[%s5 + $0x20] sm:$0xff]
  %v574 = vld [vmem:[%s5 + $0x28] sm:$0xff]
  %v575 = vld [vmem:[%s5 + $0x30] sm:$0xff]
  %v576 = vld [vmem:[%s5 + $0x38] sm:$0xff]
  %v577 = vld [vmem:[%s5 + $0x40] sm:$0xff]
  %v578 = vld [vmem:[%s5 + $0x48] sm:$0xff]
  %v579 = vld [vmem:[%s5 + $0x50] sm:$0xff]
  %v580 = vld [vmem:[%s5 + $0x58] sm:$0xff]
  %v581 = vld [vmem:[%s5 + $0x60] sm:$0xff]
  %v582 = vld [vmem:[%s5 + $0x68] sm:$0xff]
  %v583 = vld [vmem:[%s5 + $0x70] sm:$0xff]
  %v584 = vld [vmem:[%s5 + $0x78] sm:$0xff]
  %v585 = vld [vmem:[%s6] sm:$0x1]
  %v586 = vld [vmem:[%s7] sm:$0x1]
  %587 = vmatpush.msra.mxu0 %v584
  %588 = vmatpush.msra.mxu0 %v583
  %589 = vmatpush.msra.mxu0 %v582
  %590 = vmatpush.msra.mxu0 %v581
  %591 = vmatpush.msra.mxu0 %v580
  %592 = vmatpush.msra.mxu0 %v579
  %593 = vmatpush.msra.mxu0 %v578
  %594 = vmatpush.msra.mxu0 %v577
  %595 = vmatpush.msra.mxu0 %v576
  %596 = vmatpush.msra.mxu0 %v575
  %597 = vmatpush.msra.mxu0 %v574
  %598 = vmatpush.msra.mxu0 %v573
  %599 = vmatpush.msra.mxu0 %v572
  %600 = vmatpush.msra.mxu0 %v571
  %601 = vmatpush.msra.mxu0 %v570
  %602 = vmatpush.msra.mxu0 %v569
  %603 = vmatmul.f32.gmra.mxu0 %v553
  %v604 = vpop.f32.mrf.mxu0
  %v605 = vadd.f32 0.0, %v604
  %606 = vmatmul.f32.gmra.mxu0 %v554
  %v607 = vpop.f32.mrf.mxu0
  %v608 = vadd.f32 0.0, %v607
  %609 = vmatmul.f32.gmra.mxu0 %v555
  %v610 = vpop.f32.mrf.mxu0
  %v611 = vadd.f32 0.0, %v610
  %612 = vmatmul.f32.gmra.mxu0 %v556
  %v613 = vpop.f32.mrf.mxu0
  %v614 = vadd.f32 0.0, %v613
  %615 = vmatmul.f32.gmra.mxu0 %v557
  %v616 = vpop.f32.mrf.mxu0
  %v617 = vadd.f32 0.0, %v616
  %618 = vmatmul.f32.gmra.mxu0 %v558
  %v619 = vpop.f32.mrf.mxu0
  %v620 = vadd.f32 0.0, %v619
  %621 = vmatmul.f32.gmra.mxu0 %v559
  %v622 = vpop.f32.mrf.mxu0
  %v623 = vadd.f32 0.0, %v622
  %624 = vmatmul.f32.gmra.mxu0 %v560
  %v625 = vpop.f32.mrf.mxu0
  %v626 = vadd.f32 0.0, %v625
  %627 = vmatmul.f32.gmra.mxu0 %v561
  %v628 = vpop.f32.mrf.mxu0
  %v629 = vadd.f32 0.0, %v628
  %630 = vmatmul.f32.gmra.mxu0 %v562
  %v631 = vpop.f32.mrf.mxu0
  %v632 = vadd.f32 0.0, %v631
  %633 = vmatmul.f32.gmra.mxu0 %v563
  %v634 = vpop.f32.mrf.mxu0
  %v635 = vadd.f32 0.0, %v634
  %636 = vmatmul.f32.gmra.mxu0 %v564
  %v637 = vpop.f32.mrf.mxu0
  %v638 = vadd.f32 0.0, %v637
  %639 = vmatmul.f32.gmra.mxu0 %v565
  %v640 = vpop.f32.mrf.mxu0
  %v641 = vadd.f32 0.0, %v640
  %642 = vmatmul.f32.gmra.mxu0 %v566
  %v643 = vpop.f32.mrf.mxu0
  %v644 = vadd.f32 0.0, %v643
  %645 = vmatmul.f32.gmra.mxu0 %v567
  %v646 = vpop.f32.mrf.mxu0
  %v647 = vadd.f32 0.0, %v646
  %648 = vmatmul.f32.gmra.mxu0 %v568
  %v649 = vpop.f32.mrf.mxu0
  %v650 = vadd.f32 0.0, %v649
  %651 = vdwg.mxu0
  %652 = vmatpush.xpose.msra.mxu0 %v650
  %653 = vmatpush.xpose.msra.mxu0 %v647
  %654 = vmatpush.xpose.msra.mxu0 %v644
  %655 = vmatpush.xpose.msra.mxu0 %v641
  %656 = vmatpush.xpose.msra.mxu0 %v638
  %657 = vmatpush.xpose.msra.mxu0 %v635
  %658 = vmatpush.xpose.msra.mxu0 %v632
  %659 = vmatpush.xpose.msra.mxu0 %v629
  %660 = vmatpush.xpose.msra.mxu0 %v626
  %661 = vmatpush.xpose.msra.mxu0 %v623
  %662 = vmatpush.xpose.msra.mxu0 %v620
  %663 = vmatpush.xpose.msra.mxu0 %v617
  %664 = vmatpush.xpose.msra.mxu0 %v614
  %665 = vmatpush.xpose.msra.mxu0 %v611
  %666 = vmatpush.xpose.msra.mxu0 %v608
  %667 = vmatpush.xpose.msra.mxu0 %v605
  %668 = vmatmul.f32.gmra.mxu0 %v585
  %v669 = vpop.f32.mrf.mxu0
  %v670 = vadd.f32 0.0, %v669
  %671 = vdwg.mxu0
  %673 = vset.pattern.permute.xlu0 7
  %674 = vperm.xlu0 %673, %v605
  %v675 = vpop.permute.xlu0 %674
  %678 = vset.pattern.permute.xlu0 7
  %679 = vperm.xlu0 %678, %v608
  %v680 = vpop.permute.xlu0 %679
  %683 = vset.pattern.permute.xlu0 7
  %684 = vperm.xlu0 %683, %v611
  %v685 = vpop.permute.xlu0 %684
  %688 = vset.pattern.permute.xlu0 7
  %689 = vperm.xlu0 %688, %v614
  %v690 = vpop.permute.xlu0 %689
  %693 = vset.pattern.permute.xlu0 7
  %694 = vperm.xlu0 %693, %v617
  %v695 = vpop.permute.xlu0 %694
  %698 = vset.pattern.permute.xlu0 7
  %699 = vperm.xlu0 %698, %v620
  %v700 = vpop.permute.xlu0 %699
  %703 = vset.pattern.permute.xlu0 7
  %704 = vperm.xlu0 %703, %v623
  %v705 = vpop.permute.xlu0 %704
  %708 = vset.pattern.permute.xlu0 7
  %709 = vperm.xlu0 %708, %v626
  %v710 = vpop.permute.xlu0 %709
  %713 = vset.pattern.permute.xlu0 7
  %714 = vperm.xlu0 %713, %v629
  %v715 = vpop.permute.xlu0 %714
  %718 = vset.pattern.permute.xlu0 7
  %719 = vperm.xlu0 %718, %v632
  %v720 = vpop.permute.xlu0 %719
  %723 = vset.pattern.permute.xlu0 7
  %724 = vperm.xlu0 %723, %v635
  %v725 = vpop.permute.xlu0 %724
  %728 = vset.pattern.permute.xlu0 7
  %729 = vperm.xlu0 %728, %v638
  %v730 = vpop.permute.xlu0 %729
  %733 = vset.pattern.permute.xlu0 7
  %734 = vperm.xlu0 %733, %v641
  %v735 = vpop.permute.xlu0 %734
  %738 = vset.pattern.permute.xlu0 7
  %739 = vperm.xlu0 %738, %v644
  %v740 = vpop.permute.xlu0 %739
  %743 = vset.pattern.permute.xlu0 7
  %744 = vperm.xlu0 %743, %v647
  %v745 = vpop.permute.xlu0 %744
  %748 = vset.pattern.permute.xlu0 7
  %749 = vperm.xlu0 %748, %v650
  %v750 = vpop.permute.xlu0 %749
  %v752 = vperm.slane %v670, 0
  %v753 = vadd.f32 %v675, %v752
  %v754 = vadd.f32 %v680, %v752
  %v755 = vadd.f32 %v685, %v752
  %v756 = vadd.f32 %v690, %v752
  %v757 = vadd.f32 %v695, %v752
  %v758 = vadd.f32 %v700, %v752
  %v759 = vadd.f32 %v705, %v752
  %v760 = vadd.f32 %v710, %v752
  %v761 = vadd.f32 %v715, %v752
  %v762 = vadd.f32 %v720, %v752
  %v763 = vadd.f32 %v725, %v752
  %v764 = vadd.f32 %v730, %v752
  %v765 = vadd.f32 %v735, %v752
  %v766 = vadd.f32 %v740, %v752
  %v767 = vadd.f32 %v745, %v752
  %v768 = vadd.f32 %v750, %v752
  %v769 = vmul.f32 %v753, 0.2
  %v770 = vmul.f32 %v754, 0.2
  %v771 = vmul.f32 %v755, 0.2
  %v772 = vmul.f32 %v756, 0.2
  %v773 = vmul.f32 %v757, 0.2
  %v774 = vmul.f32 %v758, 0.2
  %v775 = vmul.f32 %v759, 0.2
  %v776 = vmul.f32 %v760, 0.2
  %v777 = vmul.f32 %v761, 0.2
  %v778 = vmul.f32 %v762, 0.2
  %v779 = vmul.f32 %v763, 0.2
  %v780 = vmul.f32 %v764, 0.2
  %v781 = vmul.f32 %v765, 0.2
  %v782 = vmul.f32 %v766, 0.2
  %v783 = vmul.f32 %v767, 0.2
  %v784 = vmul.f32 %v768, 0.2
  %v785 = vmax.f32 %v753, %v769
  %v786 = vmax.f32 %v754, %v770
  %v787 = vmax.f32 %v755, %v771
  %v788 = vmax.f32 %v756, %v772
  %v789 = vmax.f32 %v757, %v773
  %v790 = vmax.f32 %v758, %v774
  %v791 = vmax.f32 %v759, %v775
  %v792 = vmax.f32 %v760, %v776
  %v793 = vmax.f32 %v761, %v777
  %v794 = vmax.f32 %v762, %v778
  %v795 = vmax.f32 %v763, %v779
  %v796 = vmax.f32 %v764, %v780
  %v797 = vmax.f32 %v765, %v781
  %v798 = vmax.f32 %v766, %v782
  %v799 = vmax.f32 %v767, %v783
  %v800 = vmax.f32 %v768, %v784
  %v801 = vsel %vm61, %v785, -1e+30
  %v802 = vsel %vm62, %v786, -1e+30
  %v803 = vsel %vm63, %v787, -1e+30
  %v804 = vsel %vm64, %v788, -1e+30
  %v805 = vsel %vm65, %v789, -1e+30
  %v806 = vsel %vm66, %v790, -1e+30
  %v807 = vsel %vm67, %v791, -1e+30
  %v808 = vsel %vm68, %v792, -1e+30
  %v809 = vsel %vm69, %v793, -1e+30
  %v810 = vsel %vm70, %v794, -1e+30
  %v811 = vsel %vm71, %v795, -1e+30
  %v812 = vsel %vm72, %v796, -1e+30
  %v813 = vsel %vm73, %v797, -1e+30
  %v814 = vsel %vm74, %v798, -1e+30
  %v815 = vsel %vm75, %v799, -1e+30
  %v816 = vsel %vm76, %v800, -1e+30
  %817 = vmax.xlane.f32.xlu0 %v801
  %v818 = vpop.xlane.xlu0 %817
  %819 = vmax.xlane.f32.xlu0 %v802
  %v820 = vpop.xlane.xlu0 %819
  %821 = vmax.xlane.f32.xlu0 %v803
  %v822 = vpop.xlane.xlu0 %821
  %823 = vmax.xlane.f32.xlu0 %v804
  %v824 = vpop.xlane.xlu0 %823
  %825 = vmax.xlane.f32.xlu0 %v805
  %v826 = vpop.xlane.xlu0 %825
  %827 = vmax.xlane.f32.xlu0 %v806
  %v828 = vpop.xlane.xlu0 %827
  %829 = vmax.xlane.f32.xlu0 %v807
  %v830 = vpop.xlane.xlu0 %829
  %831 = vmax.xlane.f32.xlu0 %v808
  %v832 = vpop.xlane.xlu0 %831
  %833 = vmax.xlane.f32.xlu0 %v809
  %v834 = vpop.xlane.xlu0 %833
  %835 = vmax.xlane.f32.xlu0 %v810
  %v836 = vpop.xlane.xlu0 %835
  %837 = vmax.xlane.f32.xlu0 %v811
  %v838 = vpop.xlane.xlu0 %837
  %839 = vmax.xlane.f32.xlu0 %v812
  %v840 = vpop.xlane.xlu0 %839
  %841 = vmax.xlane.f32.xlu0 %v813
  %v842 = vpop.xlane.xlu0 %841
  %843 = vmax.xlane.f32.xlu0 %v814
  %v844 = vpop.xlane.xlu0 %843
  %845 = vmax.xlane.f32.xlu0 %v815
  %v846 = vpop.xlane.xlu0 %845
  %847 = vmax.xlane.f32.xlu0 %v816
  %v848 = vpop.xlane.xlu0 %847
  %v849 = vsub.f32 %v801, %v818
  %v850 = vsub.f32 %v802, %v820
  %v851 = vsub.f32 %v803, %v822
  %v852 = vsub.f32 %v804, %v824
  %v853 = vsub.f32 %v805, %v826
  %v854 = vsub.f32 %v806, %v828
  %v855 = vsub.f32 %v807, %v830
  %v856 = vsub.f32 %v808, %v832
  %v857 = vsub.f32 %v809, %v834
  %v858 = vsub.f32 %v810, %v836
  %v859 = vsub.f32 %v811, %v838
  %v860 = vsub.f32 %v812, %v840
  %v861 = vsub.f32 %v813, %v842
  %v862 = vsub.f32 %v814, %v844
  %v863 = vsub.f32 %v815, %v846
  %v864 = vsub.f32 %v816, %v848
  %v865 = vmul.f32 %v849, 1.442695
  %v866 = vpow.pop %v865
  %v867 = vmul.f32 %v850, 1.442695
  %v868 = vpow.pop %v867
  %v869 = vmul.f32 %v851, 1.442695
  %v870 = vpow.pop %v869
  %v871 = vmul.f32 %v852, 1.442695
  %v872 = vpow.pop %v871
  %v873 = vmul.f32 %v853, 1.442695
  %v874 = vpow.pop %v873
  %v875 = vmul.f32 %v854, 1.442695
  %v876 = vpow.pop %v875
  %v877 = vmul.f32 %v855, 1.442695
  %v878 = vpow.pop %v877
  %v879 = vmul.f32 %v856, 1.442695
  %v880 = vpow.pop %v879
  %v881 = vmul.f32 %v857, 1.442695
  %v882 = vpow.pop %v881
  %v883 = vmul.f32 %v858, 1.442695
  %v884 = vpow.pop %v883
  %v885 = vmul.f32 %v859, 1.442695
  %v886 = vpow.pop %v885
  %v887 = vmul.f32 %v860, 1.442695
  %v888 = vpow.pop %v887
  %v889 = vmul.f32 %v861, 1.442695
  %v890 = vpow.pop %v889
  %v891 = vmul.f32 %v862, 1.442695
  %v892 = vpow.pop %v891
  %v893 = vmul.f32 %v863, 1.442695
  %v894 = vpow.pop %v893
  %v895 = vmul.f32 %v864, 1.442695
  %v896 = vpow.pop %v895
  %897 = vadd.xlane.f32.xlu0 %v866
  %v898 = vpop.xlane.xlu0 %897
  %899 = vadd.xlane.f32.xlu0 %v868
  %v900 = vpop.xlane.xlu0 %899
  %901 = vadd.xlane.f32.xlu0 %v870
  %v902 = vpop.xlane.xlu0 %901
  %903 = vadd.xlane.f32.xlu0 %v872
  %v904 = vpop.xlane.xlu0 %903
  %905 = vadd.xlane.f32.xlu0 %v874
  %v906 = vpop.xlane.xlu0 %905
  %907 = vadd.xlane.f32.xlu0 %v876
  %v908 = vpop.xlane.xlu0 %907
  %909 = vadd.xlane.f32.xlu0 %v878
  %v910 = vpop.xlane.xlu0 %909
  %911 = vadd.xlane.f32.xlu0 %v880
  %v912 = vpop.xlane.xlu0 %911
  %913 = vadd.xlane.f32.xlu0 %v882
  %v914 = vpop.xlane.xlu0 %913
  %915 = vadd.xlane.f32.xlu0 %v884
  %v916 = vpop.xlane.xlu0 %915
  %917 = vadd.xlane.f32.xlu0 %v886
  %v918 = vpop.xlane.xlu0 %917
  %919 = vadd.xlane.f32.xlu0 %v888
  %v920 = vpop.xlane.xlu0 %919
  %921 = vadd.xlane.f32.xlu0 %v890
  %v922 = vpop.xlane.xlu0 %921
  %923 = vadd.xlane.f32.xlu0 %v892
  %v924 = vpop.xlane.xlu0 %923
  %925 = vadd.xlane.f32.xlu0 %v894
  %v926 = vpop.xlane.xlu0 %925
  %927 = vadd.xlane.f32.xlu0 %v896
  %v928 = vpop.xlane.xlu0 %927
  %v929 = vrcp.pop %v898
  %v930 = vrcp.pop %v900
  %v931 = vrcp.pop %v902
  %v932 = vrcp.pop %v904
  %v933 = vrcp.pop %v906
  %v934 = vrcp.pop %v908
  %v935 = vrcp.pop %v910
  %v936 = vrcp.pop %v912
  %v937 = vrcp.pop %v914
  %v938 = vrcp.pop %v916
  %v939 = vrcp.pop %v918
  %v940 = vrcp.pop %v920
  %v941 = vrcp.pop %v922
  %v942 = vrcp.pop %v924
  %v943 = vrcp.pop %v926
  %v944 = vrcp.pop %v928
  %v945 = vmul.f32 %v866, %v929
  %v946 = vmul.f32 %v868, %v930
  %v947 = vmul.f32 %v870, %v931
  %v948 = vmul.f32 %v872, %v932
  %v949 = vmul.f32 %v874, %v933
  %v950 = vmul.f32 %v876, %v934
  %v951 = vmul.f32 %v878, %v935
  %v952 = vmul.f32 %v880, %v936
  %v953 = vmul.f32 %v882, %v937
  %v954 = vmul.f32 %v884, %v938
  %v955 = vmul.f32 %v886, %v939
  %v956 = vmul.f32 %v888, %v940
  %v957 = vmul.f32 %v890, %v941
  %v958 = vmul.f32 %v892, %v942
  %v959 = vmul.f32 %v894, %v943
  %v960 = vmul.f32 %v896, %v944
  %v962 = vperm.slane %v586, 0
  %964 = vmatpush.msra.mxu0 %v650
  %965 = vmatpush.msra.mxu0 %v647
  %966 = vmatpush.msra.mxu0 %v644
  %967 = vmatpush.msra.mxu0 %v641
  %968 = vmatpush.msra.mxu0 %v638
  %969 = vmatpush.msra.mxu0 %v635
  %970 = vmatpush.msra.mxu0 %v632
  %971 = vmatpush.msra.mxu0 %v629
  %972 = vmatpush.msra.mxu0 %v626
  %973 = vmatpush.msra.mxu0 %v623
  %974 = vmatpush.msra.mxu0 %v620
  %975 = vmatpush.msra.mxu0 %v617
  %976 = vmatpush.msra.mxu0 %v614
  %977 = vmatpush.msra.mxu0 %v611
  %978 = vmatpush.msra.mxu0 %v608
  %979 = vmatpush.msra.mxu0 %v605
  %980 = vmatmul.f32.gmra.mxu0 %v945
  %v981 = vpop.f32.mrf.mxu0
  %v982 = vadd.f32 %v962, %v981
  %983 = vmatmul.f32.gmra.mxu0 %v946
  %v984 = vpop.f32.mrf.mxu0
  %v985 = vadd.f32 %v962, %v984
  %986 = vmatmul.f32.gmra.mxu0 %v947
  %v987 = vpop.f32.mrf.mxu0
  %v988 = vadd.f32 %v962, %v987
  %989 = vmatmul.f32.gmra.mxu0 %v948
  %v990 = vpop.f32.mrf.mxu0
  %v991 = vadd.f32 %v962, %v990
  %992 = vmatmul.f32.gmra.mxu0 %v949
  %v993 = vpop.f32.mrf.mxu0
  %v994 = vadd.f32 %v962, %v993
  %995 = vmatmul.f32.gmra.mxu0 %v950
  %v996 = vpop.f32.mrf.mxu0
  %v997 = vadd.f32 %v962, %v996
  %998 = vmatmul.f32.gmra.mxu0 %v951
  %v999 = vpop.f32.mrf.mxu0
  %v1000 = vadd.f32 %v962, %v999
  %1001 = vmatmul.f32.gmra.mxu0 %v952
  %v1002 = vpop.f32.mrf.mxu0
  %v1003 = vadd.f32 %v962, %v1002
  %1004 = vmatmul.f32.gmra.mxu0 %v953
  %v1005 = vpop.f32.mrf.mxu0
  %v1006 = vadd.f32 %v962, %v1005
  %1007 = vmatmul.f32.gmra.mxu0 %v954
  %v1008 = vpop.f32.mrf.mxu0
  %v1009 = vadd.f32 %v962, %v1008
  %1010 = vmatmul.f32.gmra.mxu0 %v955
  %v1011 = vpop.f32.mrf.mxu0
  %v1012 = vadd.f32 %v962, %v1011
  %1013 = vmatmul.f32.gmra.mxu0 %v956
  %v1014 = vpop.f32.mrf.mxu0
  %v1015 = vadd.f32 %v962, %v1014
  %1016 = vmatmul.f32.gmra.mxu0 %v957
  %v1017 = vpop.f32.mrf.mxu0
  %v1018 = vadd.f32 %v962, %v1017
  %1019 = vmatmul.f32.gmra.mxu0 %v958
  %v1020 = vpop.f32.mrf.mxu0
  %v1021 = vadd.f32 %v962, %v1020
  %1022 = vmatmul.f32.gmra.mxu0 %v959
  %v1023 = vpop.f32.mrf.mxu0
  %v1024 = vadd.f32 %v962, %v1023
  %1025 = vmatmul.f32.gmra.mxu0 %v960
  %v1026 = vpop.f32.mrf.mxu0
  %v1027 = vadd.f32 %v962, %v1026
  %1028 = vdwg.mxu0
  %1029 = vst [vmem:[%s8] sm:$0xff] %v982
  %1030 = vst [vmem:[%s8 + $0x8] sm:$0xff] %v985
  %1031 = vst [vmem:[%s8 + $0x10] sm:$0xff] %v988
  %1032 = vst [vmem:[%s8 + $0x18] sm:$0xff] %v991
  %1033 = vst [vmem:[%s8 + $0x20] sm:$0xff] %v994
  %1034 = vst [vmem:[%s8 + $0x28] sm:$0xff] %v997
  %1035 = vst [vmem:[%s8 + $0x30] sm:$0xff] %v1000
  %1036 = vst [vmem:[%s8 + $0x38] sm:$0xff] %v1003
  %1037 = vst [vmem:[%s8 + $0x40] sm:$0xff] %v1006
  %1038 = vst [vmem:[%s8 + $0x48] sm:$0xff] %v1009
  %1039 = vst [vmem:[%s8 + $0x50] sm:$0xff] %v1012
  %1040 = vst [vmem:[%s8 + $0x58] sm:$0xff] %v1015
  %1041 = vst [vmem:[%s8 + $0x60] sm:$0xff] %v1018
  %1042 = vst [vmem:[%s8 + $0x68] sm:$0xff] %v1021
  %1043 = vst [vmem:[%s8 + $0x70] sm:$0xff] %v1024
  %1044 = vst [vmem:[%s8 + $0x78] sm:$0xff] %v1027
  // Predicated region
  $region34: #{p0gat_forward.1} parent=0 // pred_check
    _
  $region35: #{p0gat_forward.1} parent=0 // pred_check_branch
    %1046 = sbr.rel (0) target = $region37
  $region36: #{p0gat_forward.1} parent=0 // pred_region
    _
  $region37: #{p0gat_forward.1} parent=0 // pred_fallthru
    _
  // Predicated region
  $region38: #{p0gat_forward.1} parent=0 // pred_check
    _
  $region39: #{p0gat_forward.1} parent=0 // pred_check_branch
    %1048 = sbr.rel (0) target = $region41
  $region40: #{p0gat_forward.1} parent=0 // pred_region
    _
  $region41: #{p0gat_forward.1} parent=0 // pred_fallthru
    _

</llo_original>
